<compile_context>
chip_gen: v7x
topology: tpu7x:2x2x1
jax: 0.10.0
libtpu: 0.0.40
codegen_flags: <defaults>
</compile_context>

<pallas_src>
import functools

import jax
import jax.numpy as jnp
from jax.experimental import pallas as pl
from jax.experimental.pallas import tpu as pltpu

_HID_PAD = 128  # lane-dense hidden width
_OUT_PAD = 8    # padded fc2 output width (vs 2); keeps output traffic tiny


def _round_up(x, m):
    return ((x + m - 1) // m) * m


def _u_t_kernel(x_ref, w1_ref, b1_ref, w2_ref, b2_ref, y_ref):
    """Fused fc1 -> ReLU -> (dropout=identity) -> fc2 on one batch tile."""
    x = x_ref[...]                                                    # [tb, IN]
    h = jnp.dot(x, w1_ref[...], preferred_element_type=jnp.float32)   # [tb, 128]
    h = jnp.maximum(h + b1_ref[...], 0.0)                             # bias + ReLU
    # TODO(synk): train-mode Dropout(p=0.5) omitted (eval semantics = identity);
    # a stochastic version would use pltpu.prng_seed + pltpu.prng_random_bits.
    y = jnp.dot(h, w2_ref[...], preferred_element_type=jnp.float32)   # [tb, 8]
    y_ref[...] = (y + b2_ref[...]).astype(y_ref.dtype)


@functools.partial(jax.jit, static_argnames=("batch_tile",))
def u_t_train_forward(x, w1, b1, w2, b2, *, batch_tile=4096):
    """x: [N, input_size] float32 -> logits [N, 2] float32."""
    n, in_f = x.shape
    hidden = w1.shape[1]
    out_f = w2.shape[1]

    # Zero-pad hidden to 128 lanes: ReLU(x@0 + 0) = 0, so padded h columns are
    # exactly zero and fc2 is unchanged. Zero-pad fc2 output to 8 lanes so the
    # extra output columns are exactly zero and [:, :out_f] is unchanged.
    w1p = jnp.zeros((in_f, _HID_PAD), w1.dtype).at[:, :hidden].set(w1)
    b1p = jnp.zeros((1, _HID_PAD), b1.dtype).at[:, :hidden].set(b1.reshape(1, -1))
    w2p = jnp.zeros((_HID_PAD, _OUT_PAD), w2.dtype).at[:hidden, :out_f].set(w2)
    b2p = jnp.zeros((1, _OUT_PAD), b2.dtype).at[:, :out_f].set(b2.reshape(1, -1))

    # Batch tile: large (amortize per-step overhead), but at most ceil(n/2) so
    # the grid has >= 2 steps (v7x megacore) whenever the batch allows it, and
    # always a multiple of 8 rows (sublane alignment).
    tile = max(8, min(batch_tile, pl.cdiv(n, 2)))
    tile = _round_up(tile, 8)
    grid = (pl.cdiv(n, tile),)

    y_pad = pl.pallas_call(
        _u_t_kernel,
        out_shape=jax.ShapeDtypeStruct((n, _OUT_PAD), jnp.float32),
        grid=grid,
        in_specs=[
            # batch-tiled activations (ragged last block handled by Pallas)
            pl.BlockSpec((tile, in_f), lambda i: (i, 0)),
            # weights / biases: full-array blocks, resident across the grid
            pl.BlockSpec((in_f, _HID_PAD), lambda i: (0, 0)),
            pl.BlockSpec((1, _HID_PAD), lambda i: (0, 0)),
            pl.BlockSpec((_HID_PAD, _OUT_PAD), lambda i: (0, 0)),
            pl.BlockSpec((1, _OUT_PAD), lambda i: (0, 0)),
        ],
        out_specs=pl.BlockSpec((tile, _OUT_PAD), lambda i: (i, 0)),
        compiler_params=pltpu.CompilerParams(
            dimension_semantics=("parallel",),
            vmem_limit_bytes=32 * 1024 * 1024,
        ),
    )(x, w1p, b1p, w2p, b2p)

    return y_pad[:, :out_f]


def init_params(key, input_size=64, hidden_size=64, out_size=2):
    """Deterministic init mimicking nn.Linear default (U[-1/sqrt(fan_in), ...])."""
    k1, k2, k3, k4 = jax.random.split(key, 4)
    bound1 = 1.0 / jnp.sqrt(input_size)
    bound2 = 1.0 / jnp.sqrt(hidden_size)
    # stored as [in, out] so forward is x @ W + b
    w1 = jax.random.uniform(k1, (input_size, hidden_size), jnp.float32,
                            -bound1, bound1)
    b1 = jax.random.uniform(k2, (1, hidden_size), jnp.float32, -bound1, bound1)
    w2 = jax.random.uniform(k3, (hidden_size, out_size), jnp.float32,
                            -bound2, bound2)
    b2 = jax.random.uniform(k4, (1, out_size), jnp.float32, -bound2, bound2)
    return w1, b1, w2, b2


if __name__ == "__main__":
    key = jax.random.PRNGKey(0)
    k_x, k_p = jax.random.split(key)

    batch, input_size, hidden_size = 8, 64, 64
    x = jax.random.normal(k_x, (batch, input_size), jnp.float32)
    w1, b1, w2, b2 = init_params(k_p, input_size, hidden_size, 2)

    y = u_t_train_forward(x, w1, b1, w2, b2)
    y = jax.block_until_ready(y)

    # reference check (pure JAX, eval-mode dropout)
    h_ref = jnp.maximum(x @ w1 + b1, 0.0)
    y_ref = h_ref @ w2 + b2
    assert y.shape == (batch, 2)
    assert jnp.allclose(y, y_ref, atol=1e-5, rtol=1e-5)

    # ragged / multi-step-grid sanity check (exercises partial last block)
    n2 = 1000
    x2 = jax.random.normal(k_x, (n2, input_size), jnp.float32)
    y2 = jax.block_until_ready(u_t_train_forward(x2, w1, b1, w2, b2))
    y2_ref = jnp.maximum(x2 @ w1 + b1, 0.0) @ w2 + b2
    assert y2.shape == (n2, 2)
    assert jnp.allclose(y2, y2_ref, atol=1e-5, rtol=1e-5)

    print("KERNEL_OK")
</pallas_src>

<mosaic_0001>
module attributes {stable_mosaic.version = 11 : i64} {
  func.func @_u_t_kernel(%arg0: i32, %arg1: memref<8x64xf32, #tpu.memory_space<vmem>>, %arg2: memref<64x128xf32, #tpu.memory_space<vmem>>, %arg3: memref<1x128xf32, #tpu.memory_space<vmem>>, %arg4: memref<128x8xf32, #tpu.memory_space<vmem>>, %arg5: memref<1x8xf32, #tpu.memory_space<vmem>>, %arg6: memref<8x8xf32, #tpu.memory_space<vmem>>) attributes {dimension_semantics = [#tpu.dimension_semantics<parallel>], iteration_bounds = array<i64: 1>, scalar_prefetch = 0 : i64, scratch_operands = 0 : i64, tpu.core_type = #tpu.core_type<tc>, window_params = [{transform_indices = @transform_0, window_bounds = array<i64: 8, 64>}, {pipeline_mode = #tpu.pipeline_mode<synchronous>, transform_indices = @transform_1, window_bounds = array<i64: 64, 128>}, {pipeline_mode = #tpu.pipeline_mode<synchronous>, transform_indices = @transform_2, window_bounds = array<i64: 1, 128>}, {pipeline_mode = #tpu.pipeline_mode<synchronous>, transform_indices = @transform_3, window_bounds = array<i64: 128, 8>}, {pipeline_mode = #tpu.pipeline_mode<synchronous>, transform_indices = @transform_4, window_bounds = array<i64: 1, 8>}, {transform_indices = @transform_5, window_bounds = array<i64: 8, 8>}]} {
    %c0 = arith.constant 0 : index
    %c0_0 = arith.constant 0 : index
    %0 = vector.load %arg1[%c0, %c0_0] : memref<8x64xf32, #tpu.memory_space<vmem>>, vector<8x64xf32>
    %c0_1 = arith.constant 0 : index
    %c0_2 = arith.constant 0 : index
    %1 = vector.load %arg2[%c0_1, %c0_2] : memref<64x128xf32, #tpu.memory_space<vmem>>, vector<64x128xf32>
    %cst = arith.constant dense<0.000000e+00> : vector<8x128xf32>
    %2 = tpu.matmul %0, %1, %cst {dimension_numbers = #tpu.dot_dimension_numbers<[1], [0], [0], [1], [0, 0, 1, 1], [], []>} : vector<8x64xf32>, vector<64x128xf32>, vector<8x128xf32> -> vector<8x128xf32>
    %c0_3 = arith.constant 0 : index
    %c0_4 = arith.constant 0 : index
    %3 = vector.load %arg3[%c0_3, %c0_4] : memref<1x128xf32, #tpu.memory_space<vmem>>, vector<1x128xf32>
    %4 = vector.broadcast %3 : vector<1x128xf32> to vector<8x128xf32>
    %5 = arith.addf %2, %4 : vector<8x128xf32>
    %cst_5 = arith.constant 0.000000e+00 : f32
    %6 = vector.broadcast %cst_5 : f32 to vector<8x128xf32>
    %7 = arith.maximumf %5, %6 : vector<8x128xf32>
    %c0_6 = arith.constant 0 : index
    %c0_7 = arith.constant 0 : index
    %8 = vector.load %arg4[%c0_6, %c0_7] : memref<128x8xf32, #tpu.memory_space<vmem>>, vector<128x8xf32>
    %cst_8 = arith.constant dense<0.000000e+00> : vector<8x8xf32>
    %9 = tpu.matmul %7, %8, %cst_8 {dimension_numbers = #tpu.dot_dimension_numbers<[1], [0], [0], [1], [0, 0, 1, 1], [], []>} : vector<8x128xf32>, vector<128x8xf32>, vector<8x8xf32> -> vector<8x8xf32>
    %c0_9 = arith.constant 0 : index
    %c0_10 = arith.constant 0 : index
    %10 = vector.load %arg5[%c0_9, %c0_10] : memref<1x8xf32, #tpu.memory_space<vmem>>, vector<1x8xf32>
    %11 = vector.broadcast %10 : vector<1x8xf32> to vector<8x8xf32>
    %12 = arith.addf %9, %11 : vector<8x8xf32>
    %c0_11 = arith.constant 0 : index
    %c0_12 = arith.constant 0 : index
    %13 = vector.load %arg6[%c0_11, %c0_12] : memref<8x8xf32, #tpu.memory_space<vmem>>, vector<8x8xf32>
    tpu.vector_store %arg6[%c0_11, %c0_12], %12 {strides = array<i32>} : memref<8x8xf32, #tpu.memory_space<vmem>>, vector<8x8xf32>,
    return
  }
  func.func @transform_0(%arg0: i32) -> (i32, i32) {
    %c0_i32 = arith.constant 0 : i32
    %c0_i32_0 = arith.constant 0 : i32
    return %arg0, %c0_i32 : i32, i32
  }
  func.func @transform_1(%arg0: i32) -> (i32, i32) {
    %c0_i32 = arith.constant 0 : i32
    %c0_i32_0 = arith.constant 0 : i32
    %c0_i32_1 = arith.constant 0 : i32
    return %c0_i32, %c0_i32_0 : i32, i32
  }
  func.func @transform_2(%arg0: i32) -> (i32, i32) {
    %c0_i32 = arith.constant 0 : i32
    %c0_i32_0 = arith.constant 0 : i32
    %c0_i32_1 = arith.constant 0 : i32
    return %c0_i32, %c0_i32_0 : i32, i32
  }
  func.func @transform_3(%arg0: i32) -> (i32, i32) {
    %c0_i32 = arith.constant 0 : i32
    %c0_i32_0 = arith.constant 0 : i32
    %c0_i32_1 = arith.constant 0 : i32
    return %c0_i32, %c0_i32_0 : i32, i32
  }
  func.func @transform_4(%arg0: i32) -> (i32, i32) {
    %c0_i32 = arith.constant 0 : i32
    %c0_i32_0 = arith.constant 0 : i32
    %c0_i32_1 = arith.constant 0 : i32
    return %c0_i32, %c0_i32_0 : i32, i32
  }
  func.func @transform_5(%arg0: i32) -> (i32, i32) {
    %c0_i32 = arith.constant 0 : i32
    %c0_i32_0 = arith.constant 0 : i32
    return %arg0, %c0_i32 : i32, i32
  }
}

</mosaic_0001>

<llo_original>
// kernel: u_t_train_forward.1
$region0: #{u_t_train_forward.1}
  #allocation0 [shape = 'u32[]', space=smem, size = 0x4, offset = 0x4, fixed_abs, tag = 'smem constant byte address 0x4 - core index']
  #allocation1 [shape = 'u32[144,128]{1,0:T(1,128)}', space=vmem, size = 0x12000, scoped, tag = 'internal scratch']
  %s0 = inlined_call_operand.vmem [shape: f32[8,64], index: 0, kind: input, shape index: {}]
  %s1 = inlined_call_operand.vmem [shape: f32[64,128], index: 1, kind: input, shape index: {}]
  %s2 = inlined_call_operand.vmem [shape: f32[1,128], index: 2, kind: input, shape index: {}]
  %s3 = inlined_call_operand.vmem [shape: f32[128,8], index: 3, kind: input, shape index: {}]
  %s4 = inlined_call_operand.vmem [shape: f32[1,8], index: 4, kind: input, shape index: {}]
  %s5 = inlined_call_operand.vmem [shape: f32[8,8], index: 5, kind: output, shape index: {}]
  %s6 = sld [smem:[#allocation0]]
  $region30: #{u_t_train_forward.1} parent=0
    _
  %s8 = ssub.s32 1, %s6
  %s9 = scalar_select 0, %s8, %s6
  // Predicated region
  $region2: #{u_t_train_forward.1} parent=0 // pred_check
    _
  $region3: #{u_t_train_forward.1} parent=0 // pred_check_branch
    %11 = sbr.rel (0) target = $region5
  $region4: #{u_t_train_forward.1} parent=0 // pred_region
    _
  $region5: #{u_t_train_forward.1} parent=0 // pred_fallthru
    _
  // Predicated region
  $region6: #{u_t_train_forward.1} parent=0 // pred_check
    _
  $region7: #{u_t_train_forward.1} parent=0 // pred_check_branch
    %13 = sbr.rel (0) target = $region9
  $region8: #{u_t_train_forward.1} parent=0 // pred_region
    _
  $region9: #{u_t_train_forward.1} parent=0 // pred_fallthru
    _
  // Predicated region
  $region10: #{u_t_train_forward.1} parent=0 // pred_check
    _
  $region11: #{u_t_train_forward.1} parent=0 // pred_check_branch
    %15 = sbr.rel (0) target = $region13
  $region12: #{u_t_train_forward.1} parent=0 // pred_region
    _
  $region13: #{u_t_train_forward.1} parent=0 // pred_fallthru
    _
  // Predicated region
  $region14: #{u_t_train_forward.1} parent=0 // pred_check
    _
  $region15: #{u_t_train_forward.1} parent=0 // pred_check_branch
    %17 = sbr.rel (0) target = $region17
  $region16: #{u_t_train_forward.1} parent=0 // pred_region
    _
  $region17: #{u_t_train_forward.1} parent=0 // pred_fallthru
    _
  // Predicated region
  $region18: #{u_t_train_forward.1} parent=0 // pred_check
    _
  $region19: #{u_t_train_forward.1} parent=0 // pred_check_branch
    %19 = sbr.rel (0) target = $region21
  $region20: #{u_t_train_forward.1} parent=0 // pred_region
    _
  $region21: #{u_t_train_forward.1} parent=0 // pred_fallthru
    _
  %v20 = vld [vmem:[%s0] sm:$0xff]
  %v21 = vld [vmem:[%s1] sm:$0xff]
  %v22 = vld [vmem:[%s1 + $0x8] sm:$0xff]
  %v23 = vld [vmem:[%s1 + $0x10] sm:$0xff]
  %v24 = vld [vmem:[%s1 + $0x18] sm:$0xff]
  %v25 = vld [vmem:[%s1 + $0x20] sm:$0xff]
  %v26 = vld [vmem:[%s1 + $0x28] sm:$0xff]
  %v27 = vld [vmem:[%s1 + $0x30] sm:$0xff]
  %v28 = vld [vmem:[%s1 + $0x38] sm:$0xff]
  %v29 = vld [vmem:[%s2] sm:$0x1]
  %v31 = vlaneseq
  %v32 = vshrl.u32 %v31, 7
  %v33 = vsub.s32 0, %v32
  %v34 = vrot.slane %v29, %v33
  %vm36 = vcmask 523264
  %v38 = vsel %vm36, %v20, 0
  %40 = vmatprep.subr.mxu0 0.0
  %41 = vmatpush1.msra.mxu0 %v21
  %42 = vmatprep.subr.mxu0 0.0
  %43 = vmatpush1.msra.mxu0 %v22
  %44 = vmatprep.subr.mxu0 0.0
  %45 = vmatpush1.msra.mxu0 %v23
  %46 = vmatprep.subr.mxu0 0.0
  %47 = vmatpush1.msra.mxu0 %v24
  %48 = vmatprep.subr.mxu0 0.0
  %49 = vmatpush1.msra.mxu0 %v25
  %50 = vmatprep.subr.mxu0 0.0
  %51 = vmatpush1.msra.mxu0 %v26
  %52 = vmatprep.subr.mxu0 0.0
  %53 = vmatpush1.msra.mxu0 %v27
  %54 = vmatprep.subr.mxu0 0.0
  %55 = vmatpush1.msra.mxu0 %v28
  %56 = vmatprep.subr.mxu0 0.0
  %57 = vmatpush1.msra.mxu0 0.0
  %58 = vmatprep.subr.mxu0 0.0
  %59 = vmatpush1.msra.mxu0 0.0
  %60 = vmatprep.subr.mxu0 0.0
  %61 = vmatpush1.msra.mxu0 0.0
  %62 = vmatprep.subr.mxu0 0.0
  %63 = vmatpush1.msra.mxu0 0.0
  %64 = vmatprep.subr.mxu0 0.0
  %65 = vmatpush1.msra.mxu0 0.0
  %66 = vmatprep.subr.mxu0 0.0
  %67 = vmatpush1.msra.mxu0 0.0
  %68 = vmatprep.subr.mxu0 0.0
  %69 = vmatpush1.msra.mxu0 0.0
  %70 = vmatprep.subr.mxu0 0.0
  %71 = vmatpush1.msra.mxu0 0.0
  %72 = vmatprep.subr.mxu0 0.0
  %73 = vmatpush1.msra.mxu0 0.0
  %74 = vmatprep.subr.mxu0 0.0
  %75 = vmatpush1.msra.mxu0 0.0
  %76 = vmatprep.subr.mxu0 0.0
  %77 = vmatpush1.msra.mxu0 0.0
  %78 = vmatprep.subr.mxu0 0.0
  %79 = vmatpush1.msra.mxu0 0.0
  %80 = vmatprep.subr.mxu0 0.0
  %81 = vmatpush1.msra.mxu0 0.0
  %82 = vmatprep.subr.mxu0 0.0
  %83 = vmatpush1.msra.mxu0 0.0
  %84 = vmatprep.subr.mxu0 0.0
  %85 = vmatpush1.msra.mxu0 0.0
  %86 = vmatprep.subr.mxu0 0.0
  %87 = vmatpush1.msra.mxu0 0.0
  %88 = vmatprep.subr.mxu0 0.0
  %89 = vmatpush1.msra.mxu0 0.0
  %90 = vmatprep.subr.mxu0 0.0
  %91 = vmatpush1.msra.mxu0 0.0
  %92 = vmatprep.subr.mxu0 0.0
  %93 = vmatpush1.msra.mxu0 0.0
  %94 = vmatprep.subr.mxu0 0.0
  %95 = vmatpush1.msra.mxu0 0.0
  %96 = vmatprep.subr.mxu0 0.0
  %97 = vmatpush1.msra.mxu0 0.0
  %98 = vmatprep.subr.mxu0 0.0
  %99 = vmatpush1.msra.mxu0 0.0
  %100 = vmatprep.subr.mxu0 0.0
  %101 = vmatpush1.msra.mxu0 0.0
  %102 = vmatprep.subr.mxu0 0.0
  %103 = vmatpush1.msra.mxu0 0.0
  %104 = vmatprep.mubr.f32.mxu0 0.0
  %105 = vmatmul.mubr.f32.gmra.mrb[0].mxu0 %v38
  %v106 = vpop.f32.mrb[0].mxu0
  %v107 = vadd.f32 %v34, %v106
  %v108 = vpop.f32.mrb[0].mxu0
  %109 = vdwg.mxu0
  %v110 = vmax.f32 %v107, 0.0
  %v111 = vld [vmem:[%s3] sm:$0xff]
  %v112 = vld [vmem:[%s3 + $0x8] sm:$0xff]
  %v113 = vld [vmem:[%s3 + $0x10] sm:$0xff]
  %v114 = vld [vmem:[%s3 + $0x18] sm:$0xff]
  %v115 = vld [vmem:[%s3 + $0x20] sm:$0xff]
  %v116 = vld [vmem:[%s3 + $0x28] sm:$0xff]
  %v117 = vld [vmem:[%s3 + $0x30] sm:$0xff]
  %v118 = vld [vmem:[%s3 + $0x38] sm:$0xff]
  %v119 = vld [vmem:[%s3 + $0x40] sm:$0xff]
  %v120 = vld [vmem:[%s3 + $0x48] sm:$0xff]
  %v121 = vld [vmem:[%s3 + $0x50] sm:$0xff]
  %v122 = vld [vmem:[%s3 + $0x58] sm:$0xff]
  %v123 = vld [vmem:[%s3 + $0x60] sm:$0xff]
  %v124 = vld [vmem:[%s3 + $0x68] sm:$0xff]
  %v125 = vld [vmem:[%s3 + $0x70] sm:$0xff]
  %v126 = vld [vmem:[%s3 + $0x78] sm:$0xff]
  %v127 = vld [vmem:[%s4] sm:$0x1]
  %v129 = vlaneseq
  %v130 = vshrl.u32 %v129, 7
  %v131 = vsub.s32 0, %v130
  %v132 = vrot.slane %v127, %v131
  %134 = vmatprep.subr.mxu0 0.0
  %135 = vmatpush1.msra.mxu0 %v111
  %136 = vmatprep.subr.mxu0 0.0
  %137 = vmatpush1.msra.mxu0 %v112
  %138 = vmatprep.subr.mxu0 0.0
  %139 = vmatpush1.msra.mxu0 %v113
  %140 = vmatprep.subr.mxu0 0.0
  %141 = vmatpush1.msra.mxu0 %v114
  %142 = vmatprep.subr.mxu0 0.0
  %143 = vmatpush1.msra.mxu0 %v115
  %144 = vmatprep.subr.mxu0 0.0
  %145 = vmatpush1.msra.mxu0 %v116
  %146 = vmatprep.subr.mxu0 0.0
  %147 = vmatpush1.msra.mxu0 %v117
  %148 = vmatprep.subr.mxu0 0.0
  %149 = vmatpush1.msra.mxu0 %v118
  %150 = vmatprep.subr.mxu0 0.0
  %151 = vmatpush1.msra.mxu0 %v119
  %152 = vmatprep.subr.mxu0 0.0
  %153 = vmatpush1.msra.mxu0 %v120
  %154 = vmatprep.subr.mxu0 0.0
  %155 = vmatpush1.msra.mxu0 %v121
  %156 = vmatprep.subr.mxu0 0.0
  %157 = vmatpush1.msra.mxu0 %v122
  %158 = vmatprep.subr.mxu0 0.0
  %159 = vmatpush1.msra.mxu0 %v123
  %160 = vmatprep.subr.mxu0 0.0
  %161 = vmatpush1.msra.mxu0 %v124
  %162 = vmatprep.subr.mxu0 0.0
  %163 = vmatpush1.msra.mxu0 %v125
  %164 = vmatprep.subr.mxu0 0.0
  %165 = vmatpush1.msra.mxu0 %v126
  %166 = vmatprep.subr.mxu0 0.0
  %167 = vmatpush1.msra.mxu0 0.0
  %168 = vmatprep.subr.mxu0 0.0
  %169 = vmatpush1.msra.mxu0 0.0
  %170 = vmatprep.subr.mxu0 0.0
  %171 = vmatpush1.msra.mxu0 0.0
  %172 = vmatprep.subr.mxu0 0.0
  %173 = vmatpush1.msra.mxu0 0.0
  %174 = vmatprep.subr.mxu0 0.0
  %175 = vmatpush1.msra.mxu0 0.0
  %176 = vmatprep.subr.mxu0 0.0
  %177 = vmatpush1.msra.mxu0 0.0
  %178 = vmatprep.subr.mxu0 0.0
  %179 = vmatpush1.msra.mxu0 0.0
  %180 = vmatprep.subr.mxu0 0.0
  %181 = vmatpush1.msra.mxu0 0.0
  %182 = vmatprep.subr.mxu0 0.0
  %183 = vmatpush1.msra.mxu0 0.0
  %184 = vmatprep.subr.mxu0 0.0
  %185 = vmatpush1.msra.mxu0 0.0
  %186 = vmatprep.subr.mxu0 0.0
  %187 = vmatpush1.msra.mxu0 0.0
  %188 = vmatprep.subr.mxu0 0.0
  %189 = vmatpush1.msra.mxu0 0.0
  %190 = vmatprep.subr.mxu0 0.0
  %191 = vmatpush1.msra.mxu0 0.0
  %192 = vmatprep.subr.mxu0 0.0
  %193 = vmatpush1.msra.mxu0 0.0
  %194 = vmatprep.subr.mxu0 0.0
  %195 = vmatpush1.msra.mxu0 0.0
  %196 = vmatprep.subr.mxu0 0.0
  %197 = vmatpush1.msra.mxu0 0.0
  %198 = vmatprep.mubr.f32.mxu0 0.0
  %199 = vmatmul.mubr.f32.gmra.mrb[0].mxu0 %v110
  %v200 = vpop.f32.mrb[0].mxu0
  %v201 = vadd.f32 %v132, %v200
  %v202 = vpop.f32.mrb[0].mxu0
  %203 = vdwg.mxu0
  %vm204 = vcmask 64512
  %205 = vst.msk [vmem:[%s5] sm:$0xff] %vm204, %v201
  // Predicated region
  $region22: #{u_t_train_forward.1} parent=0 // pred_check
    _
  $region23: #{u_t_train_forward.1} parent=0 // pred_check_branch
    %207 = sbr.rel (0) target = $region25
  $region24: #{u_t_train_forward.1} parent=0 // pred_region
    _
  $region25: #{u_t_train_forward.1} parent=0 // pred_fallthru
    _
  // Predicated region
  $region26: #{u_t_train_forward.1} parent=0 // pred_check
    _
  $region27: #{u_t_train_forward.1} parent=0 // pred_check_branch
    %209 = sbr.rel (0) target = $region29
  $region28: #{u_t_train_forward.1} parent=0 // pred_region
    _
  $region29: #{u_t_train_forward.1} parent=0 // pred_fallthru
    _

</llo_original>
